<compile_context>
chip_gen: v6e
topology: v6e:2x2x1
jax: 0.10.0
libtpu: 0.0.40
codegen_flags: <defaults>
</compile_context>

<pallas_src>
from functools import partial

import numpy as np
import jax
import jax.numpy as jnp
from jax import lax
from jax.experimental import pallas as pl
from jax.experimental.pallas import tpu as pltpu

_LANE = 128
_SUBLANE = 8


def _round_up(x, m):
    return -(-x // m) * m


def _vmem_capacity_bytes():
    try:
        return int(pltpu.get_tpu_info().vmem_capacity_bytes)
    except Exception:
        return 64 * 1024 * 1024  # conservative (v7x) fallback


# ---------------------------------------------------------------------------
# Fast path: table resident in VMEM, register-level gather, lane-dense output.
# ---------------------------------------------------------------------------
def _vmem_gather_kernel(idx_ref, table_ref, out_ref, *, group):
    # idx_ref:   (n_pad,) int32        SMEM scalar prefetch (data + offset, flat)
    # table_ref: (V, E)                whole table in VMEM (constant index_map
    #                                  -> DMA'd from HBM once, reused all steps)
    # out_ref:   (r_super, group*E)    output block; each row packs `group`
    #                                  logical embedding rows along lanes.
    r_super = out_ref.shape[0]
    base = pl.program_id(0) * r_super * group

    def wave(w, carry):
        # Assemble one aligned (8, group*E) tile in vregs, then do a single
        # unmasked lane-dense store (no partial vst.msk).
        rows = []
        for s in range(_SUBLANE):                                  # static
            parts = []
            for g in range(group):                                 # static
                row = idx_ref[base + (w * _SUBLANE + s) * group + g]
                parts.append(table_ref[pl.ds(row, 1), :])          # (1, E)
            rows.append(parts[0] if group == 1
                        else jnp.concatenate(parts, axis=1))       # (1, group*E)
        tile = jnp.concatenate(rows, axis=0)                       # (8, group*E)
        start = pl.multiple_of(w * _SUBLANE, _SUBLANE)
        out_ref[pl.ds(start, _SUBLANE), :] = tile
        return carry

    lax.fori_loop(0, r_super // _SUBLANE, wave, 0)


# ---------------------------------------------------------------------------
# Fallback path: table stays in HBM, per-row DMA gather with a semaphore ring.
# ---------------------------------------------------------------------------
def _hbm_gather_kernel(idx_ref, table_hbm, out_ref, sems):
    # idx_ref:   (n_pad,) int32   SMEM scalar prefetch
    # table_hbm: (V, E)           raw HBM ref (memory_space=pl.ANY)
    # out_ref:   (rows, E)        VMEM output block
    # sems:      (nsem,)          DMA semaphore ring (caps copies in flight)
    rows = out_ref.shape[0]
    nsem = sems.shape[0]
    base = pl.program_id(0) * rows

    def _start(r, row):
        pltpu.make_async_copy(
            table_hbm.at[pl.ds(row, 1), :],
            out_ref.at[pl.ds(r, 1), :],
            sems.at[r % nsem],
        ).start()

    def _wait(r):
        # Equivalent descriptor just to wait on the right semaphore with the
        # right byte count (the source row used here is irrelevant).
        pltpu.make_async_copy(
            table_hbm.at[pl.ds(0, 1), :],
            out_ref.at[pl.ds(r, 1), :],
            sems.at[r % nsem],
        ).wait()

    # Prologue: fill the ring (nsem <= rows, nsem is small and static).
    for r in range(nsem):
        _start(r, idx_ref[base + r])

    # Steady state: read the next index from SMEM *before* waiting, wait for
    # the copy that used this slot, then reuse the slot.
    def steady(r, carry):
        row = idx_ref[base + r]
        _wait(r - nsem)
        _start(r, row)
        return carry

    lax.fori_loop(nsem, rows, steady, 0, unroll=8)

    # Drain the last `nsem` outstanding copies.
    def drain(r, carry):
        _wait(r)
        return carry

    lax.fori_loop(rows - nsem, rows, drain, 0)


# ---------------------------------------------------------------------------
# Wrapper
# ---------------------------------------------------------------------------
def feature_embedding(data, offsets, table, *, block_rows=512, force_path=None,
                      clamp_indices=False):
    """Returns table[data + offsets[None, :]] with shape (B, F, E).

    data:    (B, F) integer indices per feature field
    offsets: (F,)   cumulative vocab offsets
    table:   (V, E) embedding table

    block_rows:    ~logical rows gathered per grid step (128-512 amortizes the
                   per-step overhead; clamped to the problem size).
    force_path:    None (auto), "vmem" or "hbm".
    clamp_indices: clamp combined indices into [0, V) instead of letting an
                   out-of-range index hit the DMA/VMEM bounds check.
    """
    B, F = data.shape
    V, E = table.shape
    dtype = table.dtype

    # Fold the offset add into the wrapper; the flat combined indices become
    # the scalar-prefetch operand (land in SMEM before the grid runs).
    idx = (data.astype(jnp.int32) + offsets.astype(jnp.int32)[None, :]).reshape(-1)
    if clamp_indices:
        idx = jnp.clip(idx, 0, V - 1)
    n = B * F

    cap = _vmem_capacity_bytes()
    vmem_limit = min(int(0.75 * cap), 100 * 1024 * 1024)

    # Padded VMEM footprint of the resident table ((8, 128) tiling), x2 for the
    # pipeline's default double buffering of the (constant) table block.
    table_vmem = _round_up(V, _SUBLANE) * _round_up(E, _LANE) * dtype.itemsize
    fits_vmem = 2 * table_vmem <= int(0.65 * cap)
    path = force_path or ("vmem" if fits_vmem else "hbm")

    if path == "vmem":
        # Pack `group` logical rows per 128-lane output row when E < 128.
        group = _LANE // E if (E < _LANE and _LANE % E == 0) else 1
        s_needed = -(-n // group)                            # super-rows needed
        r_target = _round_up(max(block_rows // group, _SUBLANE), _SUBLANE)
        r_super = min(r_target, _round_up(s_needed, _SUBLANE))
        num_chunks = -(-s_needed // r_super)
        n_pad = num_chunks * r_super * group
        if n_pad > n:
            idx = jnp.pad(idx, (0, n_pad - n))               # pads gather row 0

        out = pl.pallas_call(
            partial(_vmem_gather_kernel, group=group),
            out_shape=jax.ShapeDtypeStruct((n_pad // group, group * E), dtype),
            grid_spec=pltpu.PrefetchScalarGridSpec(
                num_scalar_prefetch=1,
                grid=(num_chunks,),
                in_specs=[
                    # Whole table, constant block index -> fetched once.
                    pl.BlockSpec((V, E), lambda c, idx_ref: (0, 0)),
                ],
                out_specs=pl.BlockSpec(
                    (r_super, group * E), lambda c, idx_ref: (c, 0)
                ),
            ),
            compiler_params=pltpu.CompilerParams(
                dimension_semantics=("parallel",),
                vmem_limit_bytes=vmem_limit,
            ),
        )(idx, table)
        out = out.reshape(n_pad, E)            # same row-major layout: free
    else:
        rows = max(_SUBLANE, min(_round_up(block_rows, _SUBLANE),
                                 _round_up(n, _SUBLANE)))
        num_chunks = -(-n // rows)
        n_pad = num_chunks * rows
        if n_pad > n:
            idx = jnp.pad(idx, (0, n_pad - n))
        nsem = min(8, rows)                    # 8 in-flight DMAs cover HBM latency

        out = pl.pallas_call(
            _hbm_gather_kernel,
            out_shape=jax.ShapeDtypeStruct((n_pad, E), dtype),
            grid_spec=pltpu.PrefetchScalarGridSpec(
                num_scalar_prefetch=1,
                grid=(num_chunks,),
                in_specs=[pl.BlockSpec(memory_space=pl.ANY)],   # table in HBM
                out_specs=pl.BlockSpec((rows, E), lambda c, idx_ref: (c, 0)),
                scratch_shapes=[pltpu.SemaphoreType.DMA((nsem,))],
            ),
            compiler_params=pltpu.CompilerParams(
                dimension_semantics=("parallel",),
                vmem_limit_bytes=vmem_limit,
            ),
        )(idx, table)

    return out[:n].reshape(B, F, E)


def make_params(feature_dims, embed_size, key):
    """Deterministic parameter construction matching Feature_Embedding.__init__."""
    vocab = int(sum(feature_dims))
    offsets = np.array([0, *np.cumsum(feature_dims)[:-1]], dtype=np.int32)
    bound = float(np.sqrt(6.0 / (vocab + embed_size)))       # xavier_uniform_
    table = jax.random.uniform(
        key, (vocab, embed_size), dtype=jnp.float32, minval=-bound, maxval=bound
    )
    return jnp.asarray(offsets), table


if __name__ == "__main__":
    feature_dims = [5, 7, 11, 13]   # 4 fields, vocab = 36
    embed_size = 32
    batch = 8

    key = jax.random.PRNGKey(0)
    k_tab, k_data = jax.random.split(key)
    offsets, table = make_params(feature_dims, embed_size, k_tab)

    maxvals = jnp.asarray(feature_dims, dtype=jnp.int32)
    data = jax.random.randint(
        k_data, (batch, len(feature_dims)), 0, maxvals, dtype=jnp.int32
    )

    # Reference (plain JAX gather) mirrors the PyTorch forward exactly.
    ref = jnp.take(table, data + offsets[None, :], axis=0)

    # Auto path selection -> VMEM-resident-table gather for this small table.
    out_vmem = jax.block_until_ready(feature_embedding(data, offsets, table))
    assert out_vmem.shape == (batch, len(feature_dims), embed_size)
    assert jnp.array_equal(out_vmem, ref)     # pure copy -> bit exact

    # Also exercise the HBM-DMA fallback path (used for very large tables).
    out_hbm = jax.block_until_ready(
        feature_embedding(data, offsets, table, force_path="hbm")
    )
    assert jnp.array_equal(out_hbm, ref)

    print("KERNEL_OK")
</pallas_src>

<mosaic_0001>
module attributes {stable_mosaic.version = 11 : i64} {
  func.func @_vmem_gather_kernel(%arg0: i32, %arg1: memref<32xi32, #tpu.memory_space<smem>>, %arg2: memref<36x32xf32, #tpu.memory_space<vmem>>, %arg3: memref<8x128xf32, #tpu.memory_space<vmem>>) attributes {dimension_semantics = [#tpu.dimension_semantics<parallel>], iteration_bounds = array<i64: 1>, scalar_prefetch = 1 : i64, scratch_operands = 0 : i64, tpu.core_type = #tpu.core_type<tc>, window_params = [{pipeline_mode = #tpu.pipeline_mode<synchronous>, transform_indices = @transform_0, window_bounds = array<i64: 36, 32>}, {transform_indices = @transform_1, window_bounds = array<i64: 8, 128>}]} {
    %c8_i32 = arith.constant 8 : i32
    %0 = arith.muli %arg0, %c8_i32 : i32
    %c4_i32 = arith.constant 4 : i32
    %1 = arith.muli %0, %c4_i32 : i32
    %c0_i32 = arith.constant 0 : i32
    %c8_i32_0 = arith.constant 8 : i32
    %2 = arith.muli %c0_i32, %c8_i32_0 : i32
    %c0_i32_1 = arith.constant 0 : i32
    %3 = arith.addi %2, %c0_i32_1 : i32
    %c4_i32_2 = arith.constant 4 : i32
    %4 = arith.muli %3, %c4_i32_2 : i32
    %5 = arith.addi %1, %4 : i32
    %c0_i32_3 = arith.constant 0 : i32
    %6 = arith.addi %5, %c0_i32_3 : i32
    %7 = arith.index_cast %6 : i32 to index
    %8 = memref.load %arg1[%7] : memref<32xi32, #tpu.memory_space<smem>>
    %9 = arith.index_cast %8 : i32 to index
    %c0 = arith.constant 0 : index
    %10 = vector.load %arg2[%9, %c0] : memref<36x32xf32, #tpu.memory_space<vmem>>, vector<1x32xf32>
    %c8_i32_4 = arith.constant 8 : i32
    %11 = arith.muli %c0_i32, %c8_i32_4 : i32
    %c0_i32_5 = arith.constant 0 : i32
    %12 = arith.addi %11, %c0_i32_5 : i32
    %c4_i32_6 = arith.constant 4 : i32
    %13 = arith.muli %12, %c4_i32_6 : i32
    %14 = arith.addi %1, %13 : i32
    %c1_i32 = arith.constant 1 : i32
    %15 = arith.addi %14, %c1_i32 : i32
    %16 = arith.index_cast %15 : i32 to index
    %17 = memref.load %arg1[%16] : memref<32xi32, #tpu.memory_space<smem>>
    %18 = arith.index_cast %17 : i32 to index
    %c0_7 = arith.constant 0 : index
    %19 = vector.load %arg2[%18, %c0_7] : memref<36x32xf32, #tpu.memory_space<vmem>>, vector<1x32xf32>
    %c8_i32_8 = arith.constant 8 : i32
    %20 = arith.muli %c0_i32, %c8_i32_8 : i32
    %c0_i32_9 = arith.constant 0 : i32
    %21 = arith.addi %20, %c0_i32_9 : i32
    %c4_i32_10 = arith.constant 4 : i32
    %22 = arith.muli %21, %c4_i32_10 : i32
    %23 = arith.addi %1, %22 : i32
    %c2_i32 = arith.constant 2 : i32
    %24 = arith.addi %23, %c2_i32 : i32
    %25 = arith.index_cast %24 : i32 to index
    %26 = memref.load %arg1[%25] : memref<32xi32, #tpu.memory_space<smem>>
    %27 = arith.index_cast %26 : i32 to index
    %c0_11 = arith.constant 0 : index
    %28 = vector.load %arg2[%27, %c0_11] : memref<36x32xf32, #tpu.memory_space<vmem>>, vector<1x32xf32>
    %c8_i32_12 = arith.constant 8 : i32
    %29 = arith.muli %c0_i32, %c8_i32_12 : i32
    %c0_i32_13 = arith.constant 0 : i32
    %30 = arith.addi %29, %c0_i32_13 : i32
    %c4_i32_14 = arith.constant 4 : i32
    %31 = arith.muli %30, %c4_i32_14 : i32
    %32 = arith.addi %1, %31 : i32
    %c3_i32 = arith.constant 3 : i32
    %33 = arith.addi %32, %c3_i32 : i32
    %34 = arith.index_cast %33 : i32 to index
    %35 = memref.load %arg1[%34] : memref<32xi32, #tpu.memory_space<smem>>
    %36 = arith.index_cast %35 : i32 to index
    %c0_15 = arith.constant 0 : index
    %37 = vector.load %arg2[%36, %c0_15] : memref<36x32xf32, #tpu.memory_space<vmem>>, vector<1x32xf32>
    %38 = tpu.concatenate %10, %19, %28, %37 in 1 : vector<1x32xf32>, vector<1x32xf32>, vector<1x32xf32>, vector<1x32xf32> -> vector<1x128xf32>
    %c8_i32_16 = arith.constant 8 : i32
    %39 = arith.muli %c0_i32, %c8_i32_16 : i32
    %c1_i32_17 = arith.constant 1 : i32
    %40 = arith.addi %39, %c1_i32_17 : i32
    %c4_i32_18 = arith.constant 4 : i32
    %41 = arith.muli %40, %c4_i32_18 : i32
    %42 = arith.addi %1, %41 : i32
    %c0_i32_19 = arith.constant 0 : i32
    %43 = arith.addi %42, %c0_i32_19 : i32
    %44 = arith.index_cast %43 : i32 to index
    %45 = memref.load %arg1[%44] : memref<32xi32, #tpu.memory_space<smem>>
    %46 = arith.index_cast %45 : i32 to index
    %c0_20 = arith.constant 0 : index
    %47 = vector.load %arg2[%46, %c0_20] : memref<36x32xf32, #tpu.memory_space<vmem>>, vector<1x32xf32>
    %c8_i32_21 = arith.constant 8 : i32
    %48 = arith.muli %c0_i32, %c8_i32_21 : i32
    %c1_i32_22 = arith.constant 1 : i32
    %49 = arith.addi %48, %c1_i32_22 : i32
    %c4_i32_23 = arith.constant 4 : i32
    %50 = arith.muli %49, %c4_i32_23 : i32
    %51 = arith.addi %1, %50 : i32
    %c1_i32_24 = arith.constant 1 : i32
    %52 = arith.addi %51, %c1_i32_24 : i32
    %53 = arith.index_cast %52 : i32 to index
    %54 = memref.load %arg1[%53] : memref<32xi32, #tpu.memory_space<smem>>
    %55 = arith.index_cast %54 : i32 to index
    %c0_25 = arith.constant 0 : index
    %56 = vector.load %arg2[%55, %c0_25] : memref<36x32xf32, #tpu.memory_space<vmem>>, vector<1x32xf32>
    %c8_i32_26 = arith.constant 8 : i32
    %57 = arith.muli %c0_i32, %c8_i32_26 : i32
    %c1_i32_27 = arith.constant 1 : i32
    %58 = arith.addi %57, %c1_i32_27 : i32
    %c4_i32_28 = arith.constant 4 : i32
    %59 = arith.muli %58, %c4_i32_28 : i32
    %60 = arith.addi %1, %59 : i32
    %c2_i32_29 = arith.constant 2 : i32
    %61 = arith.addi %60, %c2_i32_29 : i32
    %62 = arith.index_cast %61 : i32 to index
    %63 = memref.load %arg1[%62] : memref<32xi32, #tpu.memory_space<smem>>
    %64 = arith.index_cast %63 : i32 to index
    %c0_30 = arith.constant 0 : index
    %65 = vector.load %arg2[%64, %c0_30] : memref<36x32xf32, #tpu.memory_space<vmem>>, vector<1x32xf32>
    %c8_i32_31 = arith.constant 8 : i32
    %66 = arith.muli %c0_i32, %c8_i32_31 : i32
    %c1_i32_32 = arith.constant 1 : i32
    %67 = arith.addi %66, %c1_i32_32 : i32
    %c4_i32_33 = arith.constant 4 : i32
    %68 = arith.muli %67, %c4_i32_33 : i32
    %69 = arith.addi %1, %68 : i32
    %c3_i32_34 = arith.constant 3 : i32
    %70 = arith.addi %69, %c3_i32_34 : i32
    %71 = arith.index_cast %70 : i32 to index
    %72 = memref.load %arg1[%71] : memref<32xi32, #tpu.memory_space<smem>>
    %73 = arith.index_cast %72 : i32 to index
    %c0_35 = arith.constant 0 : index
    %74 = vector.load %arg2[%73, %c0_35] : memref<36x32xf32, #tpu.memory_space<vmem>>, vector<1x32xf32>
    %75 = tpu.concatenate %47, %56, %65, %74 in 1 : vector<1x32xf32>, vector<1x32xf32>, vector<1x32xf32>, vector<1x32xf32> -> vector<1x128xf32>
    %c8_i32_36 = arith.constant 8 : i32
    %76 = arith.muli %c0_i32, %c8_i32_36 : i32
    %c2_i32_37 = arith.constant 2 : i32
    %77 = arith.addi %76, %c2_i32_37 : i32
    %c4_i32_38 = arith.constant 4 : i32
    %78 = arith.muli %77, %c4_i32_38 : i32
    %79 = arith.addi %1, %78 : i32
    %c0_i32_39 = arith.constant 0 : i32
    %80 = arith.addi %79, %c0_i32_39 : i32
    %81 = arith.index_cast %80 : i32 to index
    %82 = memref.load %arg1[%81] : memref<32xi32, #tpu.memory_space<smem>>
    %83 = arith.index_cast %82 : i32 to index
    %c0_40 = arith.constant 0 : index
    %84 = vector.load %arg2[%83, %c0_40] : memref<36x32xf32, #tpu.memory_space<vmem>>, vector<1x32xf32>
    %c8_i32_41 = arith.constant 8 : i32
    %85 = arith.muli %c0_i32, %c8_i32_41 : i32
    %c2_i32_42 = arith.constant 2 : i32
    %86 = arith.addi %85, %c2_i32_42 : i32
    %c4_i32_43 = arith.constant 4 : i32
    %87 = arith.muli %86, %c4_i32_43 : i32
    %88 = arith.addi %1, %87 : i32
    %c1_i32_44 = arith.constant 1 : i32
    %89 = arith.addi %88, %c1_i32_44 : i32
    %90 = arith.index_cast %89 : i32 to index
    %91 = memref.load %arg1[%90] : memref<32xi32, #tpu.memory_space<smem>>
    %92 = arith.index_cast %91 : i32 to index
    %c0_45 = arith.constant 0 : index
    %93 = vector.load %arg2[%92, %c0_45] : memref<36x32xf32, #tpu.memory_space<vmem>>, vector<1x32xf32>
    %c8_i32_46 = arith.constant 8 : i32
    %94 = arith.muli %c0_i32, %c8_i32_46 : i32
    %c2_i32_47 = arith.constant 2 : i32
    %95 = arith.addi %94, %c2_i32_47 : i32
    %c4_i32_48 = arith.constant 4 : i32
    %96 = arith.muli %95, %c4_i32_48 : i32
    %97 = arith.addi %1, %96 : i32
    %c2_i32_49 = arith.constant 2 : i32
    %98 = arith.addi %97, %c2_i32_49 : i32
    %99 = arith.index_cast %98 : i32 to index
    %100 = memref.load %arg1[%99] : memref<32xi32, #tpu.memory_space<smem>>
    %101 = arith.index_cast %100 : i32 to index
    %c0_50 = arith.constant 0 : index
    %102 = vector.load %arg2[%101, %c0_50] : memref<36x32xf32, #tpu.memory_space<vmem>>, vector<1x32xf32>
    %c8_i32_51 = arith.constant 8 : i32
    %103 = arith.muli %c0_i32, %c8_i32_51 : i32
    %c2_i32_52 = arith.constant 2 : i32
    %104 = arith.addi %103, %c2_i32_52 : i32
    %c4_i32_53 = arith.constant 4 : i32
    %105 = arith.muli %104, %c4_i32_53 : i32
    %106 = arith.addi %1, %105 : i32
    %c3_i32_54 = arith.constant 3 : i32
    %107 = arith.addi %106, %c3_i32_54 : i32
    %108 = arith.index_cast %107 : i32 to index
    %109 = memref.load %arg1[%108] : memref<32xi32, #tpu.memory_space<smem>>
    %110 = arith.index_cast %109 : i32 to index
    %c0_55 = arith.constant 0 : index
    %111 = vector.load %arg2[%110, %c0_55] : memref<36x32xf32, #tpu.memory_space<vmem>>, vector<1x32xf32>
    %112 = tpu.concatenate %84, %93, %102, %111 in 1 : vector<1x32xf32>, vector<1x32xf32>, vector<1x32xf32>, vector<1x32xf32> -> vector<1x128xf32>
    %c8_i32_56 = arith.constant 8 : i32
    %113 = arith.muli %c0_i32, %c8_i32_56 : i32
    %c3_i32_57 = arith.constant 3 : i32
    %114 = arith.addi %113, %c3_i32_57 : i32
    %c4_i32_58 = arith.constant 4 : i32
    %115 = arith.muli %114, %c4_i32_58 : i32
    %116 = arith.addi %1, %115 : i32
    %c0_i32_59 = arith.constant 0 : i32
    %117 = arith.addi %116, %c0_i32_59 : i32
    %118 = arith.index_cast %117 : i32 to index
    %119 = memref.load %arg1[%118] : memref<32xi32, #tpu.memory_space<smem>>
    %120 = arith.index_cast %119 : i32 to index
    %c0_60 = arith.constant 0 : index
    %121 = vector.load %arg2[%120, %c0_60] : memref<36x32xf32, #tpu.memory_space<vmem>>, vector<1x32xf32>
    %c8_i32_61 = arith.constant 8 : i32
    %122 = arith.muli %c0_i32, %c8_i32_61 : i32
    %c3_i32_62 = arith.constant 3 : i32
    %123 = arith.addi %122, %c3_i32_62 : i32
    %c4_i32_63 = arith.constant 4 : i32
    %124 = arith.muli %123, %c4_i32_63 : i32
    %125 = arith.addi %1, %124 : i32
    %c1_i32_64 = arith.constant 1 : i32
    %126 = arith.addi %125, %c1_i32_64 : i32
    %127 = arith.index_cast %126 : i32 to index
    %128 = memref.load %arg1[%127] : memref<32xi32, #tpu.memory_space<smem>>
    %129 = arith.index_cast %128 : i32 to index
    %c0_65 = arith.constant 0 : index
    %130 = vector.load %arg2[%129, %c0_65] : memref<36x32xf32, #tpu.memory_space<vmem>>, vector<1x32xf32>
    %c8_i32_66 = arith.constant 8 : i32
    %131 = arith.muli %c0_i32, %c8_i32_66 : i32
    %c3_i32_67 = arith.constant 3 : i32
    %132 = arith.addi %131, %c3_i32_67 : i32
    %c4_i32_68 = arith.constant 4 : i32
    %133 = arith.muli %132, %c4_i32_68 : i32
    %134 = arith.addi %1, %133 : i32
    %c2_i32_69 = arith.constant 2 : i32
    %135 = arith.addi %134, %c2_i32_69 : i32
    %136 = arith.index_cast %135 : i32 to index
    %137 = memref.load %arg1[%136] : memref<32xi32, #tpu.memory_space<smem>>
    %138 = arith.index_cast %137 : i32 to index
    %c0_70 = arith.constant 0 : index
    %139 = vector.load %arg2[%138, %c0_70] : memref<36x32xf32, #tpu.memory_space<vmem>>, vector<1x32xf32>
    %c8_i32_71 = arith.constant 8 : i32
    %140 = arith.muli %c0_i32, %c8_i32_71 : i32
    %c3_i32_72 = arith.constant 3 : i32
    %141 = arith.addi %140, %c3_i32_72 : i32
    %c4_i32_73 = arith.constant 4 : i32
    %142 = arith.muli %141, %c4_i32_73 : i32
    %143 = arith.addi %1, %142 : i32
    %c3_i32_74 = arith.constant 3 : i32
    %144 = arith.addi %143, %c3_i32_74 : i32
    %145 = arith.index_cast %144 : i32 to index
    %146 = memref.load %arg1[%145] : memref<32xi32, #tpu.memory_space<smem>>
    %147 = arith.index_cast %146 : i32 to index
    %c0_75 = arith.constant 0 : index
    %148 = vector.load %arg2[%147, %c0_75] : memref<36x32xf32, #tpu.memory_space<vmem>>, vector<1x32xf32>
    %149 = tpu.concatenate %121, %130, %139, %148 in 1 : vector<1x32xf32>, vector<1x32xf32>, vector<1x32xf32>, vector<1x32xf32> -> vector<1x128xf32>
    %c8_i32_76 = arith.constant 8 : i32
    %150 = arith.muli %c0_i32, %c8_i32_76 : i32
    %c4_i32_77 = arith.constant 4 : i32
    %151 = arith.addi %150, %c4_i32_77 : i32
    %c4_i32_78 = arith.constant 4 : i32
    %152 = arith.muli %151, %c4_i32_78 : i32
    %153 = arith.addi %1, %152 : i32
    %c0_i32_79 = arith.constant 0 : i32
    %154 = arith.addi %153, %c0_i32_79 : i32
    %155 = arith.index_cast %154 : i32 to index
    %156 = memref.load %arg1[%155] : memref<32xi32, #tpu.memory_space<smem>>
    %157 = arith.index_cast %156 : i32 to index
    %c0_80 = arith.constant 0 : index
    %158 = vector.load %arg2[%157, %c0_80] : memref<36x32xf32, #tpu.memory_space<vmem>>, vector<1x32xf32>
    %c8_i32_81 = arith.constant 8 : i32
    %159 = arith.muli %c0_i32, %c8_i32_81 : i32
    %c4_i32_82 = arith.constant 4 : i32
    %160 = arith.addi %159, %c4_i32_82 : i32
    %c4_i32_83 = arith.constant 4 : i32
    %161 = arith.muli %160, %c4_i32_83 : i32
    %162 = arith.addi %1, %161 : i32
    %c1_i32_84 = arith.constant 1 : i32
    %163 = arith.addi %162, %c1_i32_84 : i32
    %164 = arith.index_cast %163 : i32 to index
    %165 = memref.load %arg1[%164] : memref<32xi32, #tpu.memory_space<smem>>
    %166 = arith.index_cast %165 : i32 to index
    %c0_85 = arith.constant 0 : index
    %167 = vector.load %arg2[%166, %c0_85] : memref<36x32xf32, #tpu.memory_space<vmem>>, vector<1x32xf32>
    %c8_i32_86 = arith.constant 8 : i32
    %168 = arith.muli %c0_i32, %c8_i32_86 : i32
    %c4_i32_87 = arith.constant 4 : i32
    %169 = arith.addi %168, %c4_i32_87 : i32
    %c4_i32_88 = arith.constant 4 : i32
    %170 = arith.muli %169, %c4_i32_88 : i32
    %171 = arith.addi %1, %170 : i32
    %c2_i32_89 = arith.constant 2 : i32
    %172 = arith.addi %171, %c2_i32_89 : i32
    %173 = arith.index_cast %172 : i32 to index
    %174 = memref.load %arg1[%173] : memref<32xi32, #tpu.memory_space<smem>>
    %175 = arith.index_cast %174 : i32 to index
    %c0_90 = arith.constant 0 : index
    %176 = vector.load %arg2[%175, %c0_90] : memref<36x32xf32, #tpu.memory_space<vmem>>, vector<1x32xf32>
    %c8_i32_91 = arith.constant 8 : i32
    %177 = arith.muli %c0_i32, %c8_i32_91 : i32
    %c4_i32_92 = arith.constant 4 : i32
    %178 = arith.addi %177, %c4_i32_92 : i32
    %c4_i32_93 = arith.constant 4 : i32
    %179 = arith.muli %178, %c4_i32_93 : i32
    %180 = arith.addi %1, %179 : i32
    %c3_i32_94 = arith.constant 3 : i32
    %181 = arith.addi %180, %c3_i32_94 : i32
    %182 = arith.index_cast %181 : i32 to index
    %183 = memref.load %arg1[%182] : memref<32xi32, #tpu.memory_space<smem>>
    %184 = arith.index_cast %183 : i32 to index
    %c0_95 = arith.constant 0 : index
    %185 = vector.load %arg2[%184, %c0_95] : memref<36x32xf32, #tpu.memory_space<vmem>>, vector<1x32xf32>
    %186 = tpu.concatenate %158, %167, %176, %185 in 1 : vector<1x32xf32>, vector<1x32xf32>, vector<1x32xf32>, vector<1x32xf32> -> vector<1x128xf32>
    %c8_i32_96 = arith.constant 8 : i32
    %187 = arith.muli %c0_i32, %c8_i32_96 : i32
    %c5_i32 = arith.constant 5 : i32
    %188 = arith.addi %187, %c5_i32 : i32
    %c4_i32_97 = arith.constant 4 : i32
    %189 = arith.muli %188, %c4_i32_97 : i32
    %190 = arith.addi %1, %189 : i32
    %c0_i32_98 = arith.constant 0 : i32
    %191 = arith.addi %190, %c0_i32_98 : i32
    %192 = arith.index_cast %191 : i32 to index
    %193 = memref.load %arg1[%192] : memref<32xi32, #tpu.memory_space<smem>>
    %194 = arith.index_cast %193 : i32 to index
    %c0_99 = arith.constant 0 : index
    %195 = vector.load %arg2[%194, %c0_99] : memref<36x32xf32, #tpu.memory_space<vmem>>, vector<1x32xf32>
    %c8_i32_100 = arith.constant 8 : i32
    %196 = arith.muli %c0_i32, %c8_i32_100 : i32
    %c5_i32_101 = arith.constant 5 : i32
    %197 = arith.addi %196, %c5_i32_101 : i32
    %c4_i32_102 = arith.constant 4 : i32
    %198 = arith.muli %197, %c4_i32_102 : i32
    %199 = arith.addi %1, %198 : i32
    %c1_i32_103 = arith.constant 1 : i32
    %200 = arith.addi %199, %c1_i32_103 : i32
    %201 = arith.index_cast %200 : i32 to index
    %202 = memref.load %arg1[%201] : memref<32xi32, #tpu.memory_space<smem>>
    %203 = arith.index_cast %202 : i32 to index
    %c0_104 = arith.constant 0 : index
    %204 = vector.load %arg2[%203, %c0_104] : memref<36x32xf32, #tpu.memory_space<vmem>>, vector<1x32xf32>
    %c8_i32_105 = arith.constant 8 : i32
    %205 = arith.muli %c0_i32, %c8_i32_105 : i32
    %c5_i32_106 = arith.constant 5 : i32
    %206 = arith.addi %205, %c5_i32_106 : i32
    %c4_i32_107 = arith.constant 4 : i32
    %207 = arith.muli %206, %c4_i32_107 : i32
    %208 = arith.addi %1, %207 : i32
    %c2_i32_108 = arith.constant 2 : i32
    %209 = arith.addi %208, %c2_i32_108 : i32
    %210 = arith.index_cast %209 : i32 to index
    %211 = memref.load %arg1[%210] : memref<32xi32, #tpu.memory_space<smem>>
    %212 = arith.index_cast %211 : i32 to index
    %c0_109 = arith.constant 0 : index
    %213 = vector.load %arg2[%212, %c0_109] : memref<36x32xf32, #tpu.memory_space<vmem>>, vector<1x32xf32>
    %c8_i32_110 = arith.constant 8 : i32
    %214 = arith.muli %c0_i32, %c8_i32_110 : i32
    %c5_i32_111 = arith.constant 5 : i32
    %215 = arith.addi %214, %c5_i32_111 : i32
    %c4_i32_112 = arith.constant 4 : i32
    %216 = arith.muli %215, %c4_i32_112 : i32
    %217 = arith.addi %1, %216 : i32
    %c3_i32_113 = arith.constant 3 : i32
    %218 = arith.addi %217, %c3_i32_113 : i32
    %219 = arith.index_cast %218 : i32 to index
    %220 = memref.load %arg1[%219] : memref<32xi32, #tpu.memory_space<smem>>
    %221 = arith.index_cast %220 : i32 to index
    %c0_114 = arith.constant 0 : index
    %222 = vector.load %arg2[%221, %c0_114] : memref<36x32xf32, #tpu.memory_space<vmem>>, vector<1x32xf32>
    %223 = tpu.concatenate %195, %204, %213, %222 in 1 : vector<1x32xf32>, vector<1x32xf32>, vector<1x32xf32>, vector<1x32xf32> -> vector<1x128xf32>
    %c8_i32_115 = arith.constant 8 : i32
    %224 = arith.muli %c0_i32, %c8_i32_115 : i32
    %c6_i32 = arith.constant 6 : i32
    %225 = arith.addi %224, %c6_i32 : i32
    %c4_i32_116 = arith.constant 4 : i32
    %226 = arith.muli %225, %c4_i32_116 : i32
    %227 = arith.addi %1, %226 : i32
    %c0_i32_117 = arith.constant 0 : i32
    %228 = arith.addi %227, %c0_i32_117 : i32
    %229 = arith.index_cast %228 : i32 to index
    %230 = memref.load %arg1[%229] : memref<32xi32, #tpu.memory_space<smem>>
    %231 = arith.index_cast %230 : i32 to index
    %c0_118 = arith.constant 0 : index
    %232 = vector.load %arg2[%231, %c0_118] : memref<36x32xf32, #tpu.memory_space<vmem>>, vector<1x32xf32>
    %c8_i32_119 = arith.constant 8 : i32
    %233 = arith.muli %c0_i32, %c8_i32_119 : i32
    %c6_i32_120 = arith.constant 6 : i32
    %234 = arith.addi %233, %c6_i32_120 : i32
    %c4_i32_121 = arith.constant 4 : i32
    %235 = arith.muli %234, %c4_i32_121 : i32
    %236 = arith.addi %1, %235 : i32
    %c1_i32_122 = arith.constant 1 : i32
    %237 = arith.addi %236, %c1_i32_122 : i32
    %238 = arith.index_cast %237 : i32 to index
    %239 = memref.load %arg1[%238] : memref<32xi32, #tpu.memory_space<smem>>
    %240 = arith.index_cast %239 : i32 to index
    %c0_123 = arith.constant 0 : index
    %241 = vector.load %arg2[%240, %c0_123] : memref<36x32xf32, #tpu.memory_space<vmem>>, vector<1x32xf32>
    %c8_i32_124 = arith.constant 8 : i32
    %242 = arith.muli %c0_i32, %c8_i32_124 : i32
    %c6_i32_125 = arith.constant 6 : i32
    %243 = arith.addi %242, %c6_i32_125 : i32
    %c4_i32_126 = arith.constant 4 : i32
    %244 = arith.muli %243, %c4_i32_126 : i32
    %245 = arith.addi %1, %244 : i32
    %c2_i32_127 = arith.constant 2 : i32
    %246 = arith.addi %245, %c2_i32_127 : i32
    %247 = arith.index_cast %246 : i32 to index
    %248 = memref.load %arg1[%247] : memref<32xi32, #tpu.memory_space<smem>>
    %249 = arith.index_cast %248 : i32 to index
    %c0_128 = arith.constant 0 : index
    %250 = vector.load %arg2[%249, %c0_128] : memref<36x32xf32, #tpu.memory_space<vmem>>, vector<1x32xf32>
    %c8_i32_129 = arith.constant 8 : i32
    %251 = arith.muli %c0_i32, %c8_i32_129 : i32
    %c6_i32_130 = arith.constant 6 : i32
    %252 = arith.addi %251, %c6_i32_130 : i32
    %c4_i32_131 = arith.constant 4 : i32
    %253 = arith.muli %252, %c4_i32_131 : i32
    %254 = arith.addi %1, %253 : i32
    %c3_i32_132 = arith.constant 3 : i32
    %255 = arith.addi %254, %c3_i32_132 : i32
    %256 = arith.index_cast %255 : i32 to index
    %257 = memref.load %arg1[%256] : memref<32xi32, #tpu.memory_space<smem>>
    %258 = arith.index_cast %257 : i32 to index
    %c0_133 = arith.constant 0 : index
    %259 = vector.load %arg2[%258, %c0_133] : memref<36x32xf32, #tpu.memory_space<vmem>>, vector<1x32xf32>
    %260 = tpu.concatenate %232, %241, %250, %259 in 1 : vector<1x32xf32>, vector<1x32xf32>, vector<1x32xf32>, vector<1x32xf32> -> vector<1x128xf32>
    %c8_i32_134 = arith.constant 8 : i32
    %261 = arith.muli %c0_i32, %c8_i32_134 : i32
    %c7_i32 = arith.constant 7 : i32
    %262 = arith.addi %261, %c7_i32 : i32
    %c4_i32_135 = arith.constant 4 : i32
    %263 = arith.muli %262, %c4_i32_135 : i32
    %264 = arith.addi %1, %263 : i32
    %c0_i32_136 = arith.constant 0 : i32
    %265 = arith.addi %264, %c0_i32_136 : i32
    %266 = arith.index_cast %265 : i32 to index
    %267 = memref.load %arg1[%266] : memref<32xi32, #tpu.memory_space<smem>>
    %268 = arith.index_cast %267 : i32 to index
    %c0_137 = arith.constant 0 : index
    %269 = vector.load %arg2[%268, %c0_137] : memref<36x32xf32, #tpu.memory_space<vmem>>, vector<1x32xf32>
    %c8_i32_138 = arith.constant 8 : i32
    %270 = arith.muli %c0_i32, %c8_i32_138 : i32
    %c7_i32_139 = arith.constant 7 : i32
    %271 = arith.addi %270, %c7_i32_139 : i32
    %c4_i32_140 = arith.constant 4 : i32
    %272 = arith.muli %271, %c4_i32_140 : i32
    %273 = arith.addi %1, %272 : i32
    %c1_i32_141 = arith.constant 1 : i32
    %274 = arith.addi %273, %c1_i32_141 : i32
    %275 = arith.index_cast %274 : i32 to index
    %276 = memref.load %arg1[%275] : memref<32xi32, #tpu.memory_space<smem>>
    %277 = arith.index_cast %276 : i32 to index
    %c0_142 = arith.constant 0 : index
    %278 = vector.load %arg2[%277, %c0_142] : memref<36x32xf32, #tpu.memory_space<vmem>>, vector<1x32xf32>
    %c8_i32_143 = arith.constant 8 : i32
    %279 = arith.muli %c0_i32, %c8_i32_143 : i32
    %c7_i32_144 = arith.constant 7 : i32
    %280 = arith.addi %279, %c7_i32_144 : i32
    %c4_i32_145 = arith.constant 4 : i32
    %281 = arith.muli %280, %c4_i32_145 : i32
    %282 = arith.addi %1, %281 : i32
    %c2_i32_146 = arith.constant 2 : i32
    %283 = arith.addi %282, %c2_i32_146 : i32
    %284 = arith.index_cast %283 : i32 to index
    %285 = memref.load %arg1[%284] : memref<32xi32, #tpu.memory_space<smem>>
    %286 = arith.index_cast %285 : i32 to index
    %c0_147 = arith.constant 0 : index
    %287 = vector.load %arg2[%286, %c0_147] : memref<36x32xf32, #tpu.memory_space<vmem>>, vector<1x32xf32>
    %c8_i32_148 = arith.constant 8 : i32
    %288 = arith.muli %c0_i32, %c8_i32_148 : i32
    %c7_i32_149 = arith.constant 7 : i32
    %289 = arith.addi %288, %c7_i32_149 : i32
    %c4_i32_150 = arith.constant 4 : i32
    %290 = arith.muli %289, %c4_i32_150 : i32
    %291 = arith.addi %1, %290 : i32
    %c3_i32_151 = arith.constant 3 : i32
    %292 = arith.addi %291, %c3_i32_151 : i32
    %293 = arith.index_cast %292 : i32 to index
    %294 = memref.load %arg1[%293] : memref<32xi32, #tpu.memory_space<smem>>
    %295 = arith.index_cast %294 : i32 to index
    %c0_152 = arith.constant 0 : index
    %296 = vector.load %arg2[%295, %c0_152] : memref<36x32xf32, #tpu.memory_space<vmem>>, vector<1x32xf32>
    %297 = tpu.concatenate %269, %278, %287, %296 in 1 : vector<1x32xf32>, vector<1x32xf32>, vector<1x32xf32>, vector<1x32xf32> -> vector<1x128xf32>
    %298 = tpu.concatenate %38, %75, %112, %149, %186, %223, %260, %297 in 0 : vector<1x128xf32>, vector<1x128xf32>, vector<1x128xf32>, vector<1x128xf32>, vector<1x128xf32>, vector<1x128xf32>, vector<1x128xf32>, vector<1x128xf32> -> vector<8x128xf32>
    %c8_i32_153 = arith.constant 8 : i32
    %299 = arith.muli %c0_i32, %c8_i32_153 : i32
    %300 = tpu.assume_multiple %299, 8 : i32
    %301 = arith.index_cast %300 : i32 to index
    %c0_154 = arith.constant 0 : index
    %302 = vector.load %arg3[%301, %c0_154] : memref<8x128xf32, #tpu.memory_space<vmem>>, vector<8x128xf32>
    tpu.vector_store %arg3[%301, %c0_154], %298 {strides = array<i32>} : memref<8x128xf32, #tpu.memory_space<vmem>>, vector<8x128xf32>,
    %c1_i32_155 = arith.constant 1 : i32
    return
  }
  func.func @transform_0(%arg0: i32, %arg1: memref<32xi32, #tpu.memory_space<smem>>) -> (i32, i32) {
    %c0_i32 = arith.constant 0 : i32
    %c0_i32_0 = arith.constant 0 : i32
    %c0_i32_1 = arith.constant 0 : i32
    return %c0_i32, %c0_i32_0 : i32, i32
  }
  func.func @transform_1(%arg0: i32, %arg1: memref<32xi32, #tpu.memory_space<smem>>) -> (i32, i32) {
    %c0_i32 = arith.constant 0 : i32
    %c0_i32_0 = arith.constant 0 : i32
    return %arg0, %c0_i32 : i32, i32
  }
}

</mosaic_0001>

<llo_original>
// kernel: tpu_custom_call.1
$region0: #{tpu_custom_call.1}
  #allocation0 [shape = 'u32[]', space=smem, size = 0x4, offset = 0x4, fixed_abs, tag = 'smem constant byte address 0x4 - core index']
  #allocation1 [shape = 'u32[144,128]{1,0:T(1,128)}', space=vmem, size = 0x12000, scoped, tag = 'internal scratch']
  #allocation2 [shape = 's32[1]{0}', space=sflag, size = 0x4, scoped, tag = 'scoped memory for tpu_custom_call.1']
  #allocation3 [shape = 'u8[512]{0}', space=smem, size = 0x200, scoped, tag = 'prefetched SMEM operand 0']
  %s0 = inlined_call_operand.vmem [shape: s32[32], index: 0, kind: input, shape index: {}]
  %s1 = inlined_call_operand.vmem [shape: f32[36,32], index: 1, kind: input, shape index: {}]
  %s2 = inlined_call_operand.hbm [shape: f32[8,128], index: 2, kind: output, shape index: {}]
  %s3 = sld [smem:[#allocation0]]
  $region14: #{tpu_custom_call.1} parent=0
    _
  %s5 = ssub.s32 1, %s3
  %s6 = scalar_select 0, %s5, %s3
  %s7 = sshll.u32 %s0, 4
  %s8 = int_to_ptr.vmem [resolvable:$true] %s7
  %10 = dma.vmem_to_smem %s8, 16, [#allocation3], [#allocation2]
  %11 = dma.done [#allocation2], 16
  %12 = sfence
  $region1: #{tpu_custom_call.1} parent=0
    #allocation4 [shape = 'u8[4096]{0}', space=vmem, size = 0x1000, scoped, tag = 'output window, operand 0, single buffered']
    #allocation5 [shape = 's32[1]{0}', space=sflag, size = 0x4, scoped, tag = 'scoped memory for tpu_custom_call.1']
    %13 = vsyncpa [#allocation5], 0
    // Predicated region
    $region2: #{tpu_custom_call.1} parent=1 // pred_check
      _
    $region3: #{tpu_custom_call.1} parent=1 // pred_check_branch
      %15 = sbr.rel (0) target = $region5
    $region4: #{tpu_custom_call.1} parent=1 // pred_region
      _
    $region5: #{tpu_custom_call.1} parent=1 // pred_fallthru
      _
    %s16 = smul.u32 0, 32
    %s17 = sld [smem:[#allocation3 + %s16]]
    %s18 = scalar_lea.vmem %s1, %s17
    %v19 = vld [vmem:[%s18] sm:$0x1]
    %s20 = sadd.s32 %s16, 1
    %s21 = sld [smem:[#allocation3 + %s20]]
    %s22 = scalar_lea.vmem %s1, %s21
    %v23 = vld [vmem:[%s22] sm:$0x1]
    %s24 = sadd.s32 %s16, 2
    %s25 = sld [smem:[#allocation3 + %s24]]
    %s26 = scalar_lea.vmem %s1, %s25
    %v27 = vld [vmem:[%s26] sm:$0x1]
    %s28 = sadd.s32 %s16, 3
    %s29 = sld [smem:[#allocation3 + %s28]]
    %s30 = scalar_lea.vmem %s1, %s29
    %v31 = vld [vmem:[%s30] sm:$0x1]
    %33 = vrot.lane.b32.xlu0 %v23, 32
    %v34 = vpop.permute.xlu0 %33
    %37 = vrot.lane.b32.xlu0 %v27, 64
    %v38 = vpop.permute.xlu0 %37
    %41 = vrot.lane.b32.xlu0 %v31, 96
    %v42 = vpop.permute.xlu0 %41
    %vm44 = vcmask 261120
    %v45 = vsel %vm44, %v19, %v34
    %vm46 = vcmask 523264
    %v47 = vsel %vm46, %v45, %v38
    %vm48 = vcmask 785408
    %v49 = vsel %vm48, %v47, %v42
    %s50 = sadd.s32 %s16, 4
    %s51 = sld [smem:[#allocation3 + %s50]]
    %s52 = scalar_lea.vmem %s1, %s51
    %v53 = vld [vmem:[%s52] sm:$0x1]
    %s54 = sadd.s32 %s16, 5
    %s55 = sld [smem:[#allocation3 + %s54]]
    %s56 = scalar_lea.vmem %s1, %s55
    %v57 = vld [vmem:[%s56] sm:$0x1]
    %s58 = sadd.s32 %s16, 6
    %s59 = sld [smem:[#allocation3 + %s58]]
    %s60 = scalar_lea.vmem %s1, %s59
    %v61 = vld [vmem:[%s60] sm:$0x1]
    %s62 = sadd.s32 %s16, 7
    %s63 = sld [smem:[#allocation3 + %s62]]
    %s64 = scalar_lea.vmem %s1, %s63
    %v65 = vld [vmem:[%s64] sm:$0x1]
    %67 = vrot.lane.b32.xlu0 %v57, 32
    %v68 = vpop.permute.xlu0 %67
    %71 = vrot.lane.b32.xlu0 %v61, 64
    %v72 = vpop.permute.xlu0 %71
    %75 = vrot.lane.b32.xlu0 %v65, 96
    %v76 = vpop.permute.xlu0 %75
    %v78 = vsel %vm44, %v53, %v68
    %v79 = vsel %vm46, %v78, %v72
    %v80 = vsel %vm48, %v79, %v76
    %s81 = sadd.s32 %s16, 8
    %s82 = sld [smem:[#allocation3 + %s81]]
    %s83 = scalar_lea.vmem %s1, %s82
    %v84 = vld [vmem:[%s83] sm:$0x1]
    %s85 = sadd.s32 %s16, 9
    %s86 = sld [smem:[#allocation3 + %s85]]
    %s87 = scalar_lea.vmem %s1, %s86
    %v88 = vld [vmem:[%s87] sm:$0x1]
    %s89 = sadd.s32 %s16, 10
    %s90 = sld [smem:[#allocation3 + %s89]]
    %s91 = scalar_lea.vmem %s1, %s90
    %v92 = vld [vmem:[%s91] sm:$0x1]
    %s93 = sadd.s32 %s16, 11
    %s94 = sld [smem:[#allocation3 + %s93]]
    %s95 = scalar_lea.vmem %s1, %s94
    %v96 = vld [vmem:[%s95] sm:$0x1]
    %98 = vrot.lane.b32.xlu0 %v88, 32
    %v99 = vpop.permute.xlu0 %98
    %102 = vrot.lane.b32.xlu0 %v92, 64
    %v103 = vpop.permute.xlu0 %102
    %106 = vrot.lane.b32.xlu0 %v96, 96
    %v107 = vpop.permute.xlu0 %106
    %v109 = vsel %vm44, %v84, %v99
    %v110 = vsel %vm46, %v109, %v103
    %v111 = vsel %vm48, %v110, %v107
    %s112 = sadd.s32 %s16, 12
    %s113 = sld [smem:[#allocation3 + %s112]]
    %s114 = scalar_lea.vmem %s1, %s113
    %v115 = vld [vmem:[%s114] sm:$0x1]
    %s116 = sadd.s32 %s16, 13
    %s117 = sld [smem:[#allocation3 + %s116]]
    %s118 = scalar_lea.vmem %s1, %s117
    %v119 = vld [vmem:[%s118] sm:$0x1]
    %s120 = sadd.s32 %s16, 14
    %s121 = sld [smem:[#allocation3 + %s120]]
    %s122 = scalar_lea.vmem %s1, %s121
    %v123 = vld [vmem:[%s122] sm:$0x1]
    %s124 = sadd.s32 %s16, 15
    %s125 = sld [smem:[#allocation3 + %s124]]
    %s126 = scalar_lea.vmem %s1, %s125
    %v127 = vld [vmem:[%s126] sm:$0x1]
    %129 = vrot.lane.b32.xlu0 %v119, 32
    %v130 = vpop.permute.xlu0 %129
    %133 = vrot.lane.b32.xlu0 %v123, 64
    %v134 = vpop.permute.xlu0 %133
    %137 = vrot.lane.b32.xlu0 %v127, 96
    %v138 = vpop.permute.xlu0 %137
    %v140 = vsel %vm44, %v115, %v130
    %v141 = vsel %vm46, %v140, %v134
    %v142 = vsel %vm48, %v141, %v138
    %s143 = sadd.s32 %s16, 16
    %s144 = sld [smem:[#allocation3 + %s143]]
    %s145 = scalar_lea.vmem %s1, %s144
    %v146 = vld [vmem:[%s145] sm:$0x1]
    %s147 = sadd.s32 %s16, 17
    %s148 = sld [smem:[#allocation3 + %s147]]
    %s149 = scalar_lea.vmem %s1, %s148
    %v150 = vld [vmem:[%s149] sm:$0x1]
    %s151 = sadd.s32 %s16, 18
    %s152 = sld [smem:[#allocation3 + %s151]]
    %s153 = scalar_lea.vmem %s1, %s152
    %v154 = vld [vmem:[%s153] sm:$0x1]
    %s155 = sadd.s32 %s16, 19
    %s156 = sld [smem:[#allocation3 + %s155]]
    %s157 = scalar_lea.vmem %s1, %s156
    %v158 = vld [vmem:[%s157] sm:$0x1]
    %160 = vrot.lane.b32.xlu0 %v150, 32
    %v161 = vpop.permute.xlu0 %160
    %164 = vrot.lane.b32.xlu0 %v154, 64
    %v165 = vpop.permute.xlu0 %164
    %168 = vrot.lane.b32.xlu0 %v158, 96
    %v169 = vpop.permute.xlu0 %168
    %v171 = vsel %vm44, %v146, %v161
    %v172 = vsel %vm46, %v171, %v165
    %v173 = vsel %vm48, %v172, %v169
    %s174 = sadd.s32 %s16, 20
    %s175 = sld [smem:[#allocation3 + %s174]]
    %s176 = scalar_lea.vmem %s1, %s175
    %v177 = vld [vmem:[%s176] sm:$0x1]
    %s178 = sadd.s32 %s16, 21
    %s179 = sld [smem:[#allocation3 + %s178]]
    %s180 = scalar_lea.vmem %s1, %s179
    %v181 = vld [vmem:[%s180] sm:$0x1]
    %s182 = sadd.s32 %s16, 22
    %s183 = sld [smem:[#allocation3 + %s182]]
    %s184 = scalar_lea.vmem %s1, %s183
    %v185 = vld [vmem:[%s184] sm:$0x1]
    %s186 = sadd.s32 %s16, 23
    %s187 = sld [smem:[#allocation3 + %s186]]
    %s188 = scalar_lea.vmem %s1, %s187
    %v189 = vld [vmem:[%s188] sm:$0x1]
    %191 = vrot.lane.b32.xlu0 %v181, 32
    %v192 = vpop.permute.xlu0 %191
    %195 = vrot.lane.b32.xlu0 %v185, 64
    %v196 = vpop.permute.xlu0 %195
    %199 = vrot.lane.b32.xlu0 %v189, 96
    %v200 = vpop.permute.xlu0 %199
    %v202 = vsel %vm44, %v177, %v192
    %v203 = vsel %vm46, %v202, %v196
    %v204 = vsel %vm48, %v203, %v200
    %s205 = sadd.s32 %s16, 24
    %s206 = sld [smem:[#allocation3 + %s205]]
    %s207 = scalar_lea.vmem %s1, %s206
    %v208 = vld [vmem:[%s207] sm:$0x1]
    %s209 = sadd.s32 %s16, 25
    %s210 = sld [smem:[#allocation3 + %s209]]
    %s211 = scalar_lea.vmem %s1, %s210
    %v212 = vld [vmem:[%s211] sm:$0x1]
    %s213 = sadd.s32 %s16, 26
    %s214 = sld [smem:[#allocation3 + %s213]]
    %s215 = scalar_lea.vmem %s1, %s214
    %v216 = vld [vmem:[%s215] sm:$0x1]
    %s217 = sadd.s32 %s16, 27
    %s218 = sld [smem:[#allocation3 + %s217]]
    %s219 = scalar_lea.vmem %s1, %s218
    %v220 = vld [vmem:[%s219] sm:$0x1]
    %222 = vrot.lane.b32.xlu0 %v212, 32
    %v223 = vpop.permute.xlu0 %222
    %226 = vrot.lane.b32.xlu0 %v216, 64
    %v227 = vpop.permute.xlu0 %226
    %230 = vrot.lane.b32.xlu0 %v220, 96
    %v231 = vpop.permute.xlu0 %230
    %v233 = vsel %vm44, %v208, %v223
    %v234 = vsel %vm46, %v233, %v227
    %v235 = vsel %vm48, %v234, %v231
    %s236 = sadd.s32 %s16, 28
    %s237 = sld [smem:[#allocation3 + %s236]]
    %s238 = scalar_lea.vmem %s1, %s237
    %v239 = vld [vmem:[%s238] sm:$0x1]
    %s240 = sadd.s32 %s16, 29
    %s241 = sld [smem:[#allocation3 + %s240]]
    %s242 = scalar_lea.vmem %s1, %s241
    %v243 = vld [vmem:[%s242] sm:$0x1]
    %s244 = sadd.s32 %s16, 30
    %s245 = sld [smem:[#allocation3 + %s244]]
    %s246 = scalar_lea.vmem %s1, %s245
    %v247 = vld [vmem:[%s246] sm:$0x1]
    %s248 = sadd.s32 %s16, 31
    %s249 = sld [smem:[#allocation3 + %s248]]
    %s250 = scalar_lea.vmem %s1, %s249
    %v251 = vld [vmem:[%s250] sm:$0x1]
    %253 = vrot.lane.b32.xlu0 %v243, 32
    %v254 = vpop.permute.xlu0 %253
    %257 = vrot.lane.b32.xlu0 %v247, 64
    %v258 = vpop.permute.xlu0 %257
    %261 = vrot.lane.b32.xlu0 %v251, 96
    %v262 = vpop.permute.xlu0 %261
    %v264 = vsel %vm44, %v239, %v254
    %v265 = vsel %vm46, %v264, %v258
    %v266 = vsel %vm48, %v265, %v262
    %v268 = vrot.slane %v80, 7
    %v271 = vrot.slane %v111, 6
    %v274 = vrot.slane %v142, 5
    %v277 = vrot.slane %v173, 4
    %v280 = vrot.slane %v204, 3
    %v283 = vrot.slane %v235, 2
    %v286 = vrot.slane %v266, 1
    %vm288 = vcmask 1040384
    %v289 = vsel %vm288, %v49, %v268
    %vm290 = vcmask 1041408
    %v291 = vsel %vm290, %v289, %v271
    %vm292 = vcmask 1042432
    %v293 = vsel %vm292, %v291, %v274
    %vm294 = vcmask 1043456
    %v295 = vsel %vm294, %v293, %v277
    %vm296 = vcmask 1044480
    %v297 = vsel %vm296, %v295, %v280
    %vm298 = vcmask 1045504
    %v299 = vsel %vm298, %v297, %v283
    %vm300 = vcmask 1046528
    %v301 = vsel %vm300, %v299, %v286
    %302 = vst [vmem:[#allocation4] sm:$0xff] %v301
    // Predicated region
    $region6: #{tpu_custom_call.1} parent=1 // pred_check
      _
    $region7: #{tpu_custom_call.1} parent=1 // pred_check_branch
      %304 = sbr.rel (0) target = $region9
    $region8: #{tpu_custom_call.1} parent=1 // pred_region
      %s306 = ssub.s32 128, 128
      %307 = vsyncadd [#allocation5], %s306
      %s309 = sshll.u32 [#allocation4], 4
      %s310 = int_to_ptr.vmem [resolvable:$true] %s309
      %312 = dma.vmem_to_hbm [thread:$0]  %s310, 128, %s2, [#allocation5]
    $region9: #{tpu_custom_call.1} parent=1 // pred_fallthru
      _
    // Predicated region
    $region10: #{tpu_custom_call.1} parent=1 // pred_check
      _
    $region11: #{tpu_custom_call.1} parent=1 // pred_check_branch
      %314 = sbr.rel (0) target = $region13
    $region12: #{tpu_custom_call.1} parent=1 // pred_region
      %315 = dma.done [#allocation5], 128
    $region13: #{tpu_custom_call.1} parent=1 // pred_fallthru
      _
    %316 = vsyncpa [#allocation5], 1

</llo_original>
